<compile_context>
chip_gen: v7x
topology: tpu7x:2x2x1
jax: 0.10.0
libtpu: 0.0.40
codegen_flags: <defaults>
</compile_context>

<pallas_src>
import math
from functools import partial

import jax
import jax.numpy as jnp
from jax.experimental import pallas as pl
from jax.experimental.pallas import tpu as pltpu


# ---------------- deterministic parameter init (matches PyTorch) ----------------

def _kaiming_leaky_weight(key, out_dim, in_dim):
    # kaiming_normal_(a=0.2, mode='fan_in', nonlinearity='leaky_relu')
    gain = math.sqrt(2.0 / (1.0 + 0.2 ** 2))
    std = gain / math.sqrt(in_dim)
    return std * jax.random.normal(key, (out_dim, in_dim), jnp.float32)


def _default_bias(key, out_dim, in_dim):
    # nn.Linear default bias init: U(-1/sqrt(fan_in), 1/sqrt(fan_in))
    bound = 1.0 / math.sqrt(in_dim)
    return jax.random.uniform(key, (out_dim,), jnp.float32, -bound, bound)


def init_params(key, z_dim, hidden_dim, base_layers, head_layers, head_dim_dict):
    params = {"base": [], "heads": {}}
    out_dim = z_dim
    for _ in range(base_layers):
        in_dim, out_dim = out_dim, hidden_dim
        key, kw, kb = jax.random.split(key, 3)
        params["base"].append(
            (_kaiming_leaky_weight(kw, out_dim, in_dim), _default_bias(kb, out_dim, in_dim))
        )
    head_in_dim = out_dim
    for name, head_dim in head_dim_dict.items():
        layers = []
        od = head_in_dim
        for i in range(head_layers):
            in_dim = od
            od = head_dim if i == head_layers - 1 else hidden_dim
            key, kw, kb = jax.random.split(key, 3)
            layers.append(
                (_kaiming_leaky_weight(kw, od, in_dim), _default_bias(kb, od, in_dim))
            )
        params["heads"][name] = layers
    return params


# ---------------- one-time weight packing (layout plumbing, zero runtime cost) -----

def _block_diag(mats):
    rows = sum(m.shape[0] for m in mats)
    cols = sum(m.shape[1] for m in mats)
    out = jnp.zeros((rows, cols), mats[0].dtype)
    r = c = 0
    for m in mats:
        out = out.at[r:r + m.shape[0], c:c + m.shape[1]].set(m)
        r += m.shape[0]
        c += m.shape[1]
    return out


def pack_params(params, *, base_layers, head_layers, head_dim_dict):
    """Pre-transpose weights to (in, out) and pack all heads into concatenated /
    block-diagonal slabs so the fused kernel does one lane-dense matmul per layer."""
    head_names = list(head_dim_dict.keys())
    packed = {"base": [], "head": []}
    for w, b in params["base"]:
        packed["base"].append((jnp.asarray(w).T, jnp.asarray(b)[None, :]))
    if head_layers > 0:
        for i in range(head_layers):
            wts = [jnp.asarray(params["heads"][n][i][0]).T for n in head_names]  # (in, out)
            bts = [jnp.asarray(params["heads"][n][i][1]) for n in head_names]
            if i == 0 and base_layers > 0:
                # shared input (base_fea) -> simple horizontal concat of outputs
                w = jnp.concatenate(wts, axis=1)
            else:
                # per-head private inputs -> block-diagonal packing
                w = _block_diag(wts)
            b = jnp.concatenate(bts, axis=0)[None, :]
            packed["head"].append((w, b))
    return packed


# ---------------- fused Pallas kernel ----------------

def _fused_mapping_kernel(*refs, n_base, n_head, base_acts, head_acts,
                          per_head_norm, num_heads):
    # refs = (z_ref, w0, b0, w1, b1, ..., out_ref)
    z_ref = refs[0]
    out_ref = refs[-1]
    prefs = refs[1:-1]

    def _pixelnorm(x):
        ms = jnp.mean(x * x, axis=1, keepdims=True)
        return x * jax.lax.rsqrt(ms + 1e-8)

    def _lrelu(x):
        return jnp.where(x >= 0.0, x, 0.2 * x)

    if per_head_norm:
        # base_layers == 0 path: z is (num_heads, TB, z_dim); normalize each head's
        # slice and lay them out along lanes so packed block-diag layers apply.
        z = z_ref[...].astype(jnp.float32)
        x = jnp.concatenate([_pixelnorm(z[h]) for h in range(num_heads)], axis=1)
    else:
        x = _pixelnorm(z_ref[...].astype(jnp.float32))

    k = 0
    for i in range(n_base):
        w = prefs[k][...]
        b = prefs[k + 1][...]
        k += 2
        x = jnp.dot(x, w, preferred_element_type=jnp.float32) + b
        if base_acts[i]:
            x = _lrelu(x)
    for i in range(n_head):
        w = prefs[k][...]
        b = prefs[k + 1][...]
        k += 2
        x = jnp.dot(x, w, preferred_element_type=jnp.float32) + b
        if head_acts[i]:
            x = _lrelu(x)

    out_ref[...] = x.astype(out_ref.dtype)


def _choose_batch_tile(batch):
    for tb in (512, 256, 128, 64, 32, 16, 8):
        if batch % tb == 0:
            return tb
    return batch


# ---------------- forward pass (matches PyTorch semantics) ----------------

def multi_head_mapping_forward(packed, z, *, base_layers, head_layers, head_dim_dict):
    head_names = list(head_dim_dict.keys())
    num_heads = len(head_names)
    head_dims = [head_dim_dict[n] for n in head_names]

    per_head_norm = base_layers == 0
    if per_head_norm:
        assert z.ndim == 3 and z.shape[0] == num_heads
        batch, z_dim = z.shape[1], z.shape[2]
    else:
        assert z.ndim == 2
        batch, z_dim = z.shape

    # LeakyReLU gating exactly as in the PyTorch constructor
    base_acts = tuple((head_layers > 0) or (i != base_layers - 1) for i in range(base_layers))
    head_acts = tuple(i != head_layers - 1 for i in range(head_layers))

    flat = []
    for w, b in packed["base"]:
        flat += [w, b]
    for w, b in packed["head"]:
        flat += [w, b]

    if head_layers > 0:
        total_out = sum(head_dims)
    elif base_layers > 0:
        total_out = packed["base"][-1][0].shape[1]    # heads are Identity -> base_fea
    else:
        total_out = num_heads * z_dim                 # heads are Identity -> norm(z[idx])

    tb = _choose_batch_tile(batch)
    grid = (batch // tb,)

    if per_head_norm:
        z_spec = pl.BlockSpec((num_heads, tb, z_dim), lambda i: (0, i, 0))
    else:
        z_spec = pl.BlockSpec((tb, z_dim), lambda i: (i, 0))
    # weights / biases stay VMEM-resident across batch tiles (same block every step)
    param_specs = [pl.BlockSpec(p.shape, lambda i: (0, 0)) for p in flat]
    out_spec = pl.BlockSpec((tb, total_out), lambda i: (i, 0))

    kernel = partial(
        _fused_mapping_kernel,
        n_base=len(packed["base"]),
        n_head=len(packed["head"]),
        base_acts=base_acts,
        head_acts=head_acts,
        per_head_norm=per_head_norm,
        num_heads=num_heads,
    )

    out = pl.pallas_call(
        kernel,
        out_shape=jax.ShapeDtypeStruct((batch, total_out), z.dtype),
        grid=grid,
        in_specs=[z_spec] + param_specs,
        out_specs=out_spec,
        compiler_params=pltpu.CompilerParams(
            dimension_semantics=("parallel",),
            vmem_limit_bytes=32 * 1024 * 1024,
        ),
    )(z, *flat)

    out_dict = {}
    if head_layers > 0:
        off = 0
        for name, d in zip(head_names, head_dims):
            out_dict[name] = out[:, off:off + d]
            off += d
    elif base_layers > 0:
        for name in head_names:
            out_dict[name] = out
    else:
        off = 0
        for name in head_names:
            out_dict[name] = out[:, off:off + z_dim]
            off += z_dim
    return out_dict


# ---------------- pure-JAX reference (for correctness check) ----------------

def _reference_forward(params, z, *, base_layers, head_layers, head_dim_dict):
    def pixelnorm(x):
        return x * jax.lax.rsqrt(jnp.mean(x * x, axis=1, keepdims=True) + 1e-8)

    def lrelu(x):
        return jnp.where(x >= 0.0, x, 0.2 * x)

    if base_layers > 0:
        x = pixelnorm(z)
        for i, (w, b) in enumerate(params["base"]):
            x = x @ w.T + b
            if (head_layers > 0) or (i != base_layers - 1):
                x = lrelu(x)
        head_inputs = {n: x for n in head_dim_dict}
    else:
        head_inputs = {n: pixelnorm(z[idx]) for idx, n in enumerate(head_dim_dict)}

    out = {}
    for n in head_dim_dict:
        h = head_inputs[n]
        for i, (w, b) in enumerate(params["heads"][n]):
            h = h @ w.T + b
            if i != head_layers - 1:
                h = lrelu(h)
        out[n] = h
    return out


# ---------------- demo ----------------

if __name__ == "__main__":
    z_dim = 32
    hidden_dim = 32
    base_layers = 2
    head_layers = 2
    head_dim_dict = {"head_a": 16, "head_b": 24}
    batch = 8

    key = jax.random.PRNGKey(0)
    key_params, key_z = jax.random.split(key)
    params = init_params(key_params, z_dim, hidden_dim, base_layers, head_layers, head_dim_dict)
    packed = pack_params(params, base_layers=base_layers, head_layers=head_layers,
                         head_dim_dict=head_dim_dict)
    z = jax.random.normal(key_z, (batch, z_dim), jnp.float32)

    out = multi_head_mapping_forward(
        packed, z,
        base_layers=base_layers,
        head_layers=head_layers,
        head_dim_dict=head_dim_dict,
    )
    out = jax.block_until_ready(out)

    assert out["head_a"].shape == (batch, 16)
    assert out["head_b"].shape == (batch, 24)

    ref = _reference_forward(params, z, base_layers=base_layers,
                             head_layers=head_layers, head_dim_dict=head_dim_dict)
    for name in head_dim_dict:
        assert jnp.allclose(out[name], ref[name], atol=1e-3, rtol=1e-3), f"mismatch in {name}"

    print("KERNEL_OK")
</pallas_src>

<mosaic_0001>
module attributes {stable_mosaic.version = 11 : i64} {
  func.func @_fused_mapping_kernel(%arg0: i32, %arg1: memref<8x32xf32, #tpu.memory_space<vmem>>, %arg2: memref<32x32xf32, #tpu.memory_space<vmem>>, %arg3: memref<1x32xf32, #tpu.memory_space<vmem>>, %arg4: memref<32x32xf32, #tpu.memory_space<vmem>>, %arg5: memref<1x32xf32, #tpu.memory_space<vmem>>, %arg6: memref<32x64xf32, #tpu.memory_space<vmem>>, %arg7: memref<1x64xf32, #tpu.memory_space<vmem>>, %arg8: memref<64x40xf32, #tpu.memory_space<vmem>>, %arg9: memref<1x40xf32, #tpu.memory_space<vmem>>, %arg10: memref<8x40xf32, #tpu.memory_space<vmem>>) attributes {dimension_semantics = [#tpu.dimension_semantics<parallel>], iteration_bounds = array<i64: 1>, scalar_prefetch = 0 : i64, scratch_operands = 0 : i64, tpu.core_type = #tpu.core_type<tc>, window_params = [{transform_indices = @transform_0, window_bounds = array<i64: 8, 32>}, {pipeline_mode = #tpu.pipeline_mode<synchronous>, transform_indices = @transform_1, window_bounds = array<i64: 32, 32>}, {pipeline_mode = #tpu.pipeline_mode<synchronous>, transform_indices = @transform_2, window_bounds = array<i64: 1, 32>}, {pipeline_mode = #tpu.pipeline_mode<synchronous>, transform_indices = @transform_3, window_bounds = array<i64: 32, 32>}, {pipeline_mode = #tpu.pipeline_mode<synchronous>, transform_indices = @transform_4, window_bounds = array<i64: 1, 32>}, {pipeline_mode = #tpu.pipeline_mode<synchronous>, transform_indices = @transform_5, window_bounds = array<i64: 32, 64>}, {pipeline_mode = #tpu.pipeline_mode<synchronous>, transform_indices = @transform_6, window_bounds = array<i64: 1, 64>}, {pipeline_mode = #tpu.pipeline_mode<synchronous>, transform_indices = @transform_7, window_bounds = array<i64: 64, 40>}, {pipeline_mode = #tpu.pipeline_mode<synchronous>, transform_indices = @transform_8, window_bounds = array<i64: 1, 40>}, {transform_indices = @transform_9, window_bounds = array<i64: 8, 40>}]} {
    %c0 = arith.constant 0 : index
    %c0_0 = arith.constant 0 : index
    %0 = vector.load %arg1[%c0, %c0_0] : memref<8x32xf32, #tpu.memory_space<vmem>>, vector<8x32xf32>
    %1 = arith.mulf %0, %0 : vector<8x32xf32>
    %cst = arith.constant dense<0.000000e+00> : vector<8xf32>
    %2 = vector.multi_reduction <add>, %1, %cst [1] : vector<8x32xf32> to vector<8xf32>
    %3 = vector.shape_cast %2 : vector<8xf32> to vector<8x1xf32>
    %cst_1 = arith.constant 3.200000e+01 : f32
    %4 = vector.broadcast %cst_1 : f32 to vector<8x1xf32>
    %5 = arith.divf %3, %4 : vector<8x1xf32>
    %cst_2 = arith.constant 9.99999993E-9 : f32
    %6 = vector.broadcast %cst_2 : f32 to vector<8x1xf32>
    %7 = arith.addf %5, %6 : vector<8x1xf32>
    %8 = math.rsqrt %7 : vector<8x1xf32>
    %9 = vector.broadcast %8 : vector<8x1xf32> to vector<8x32xf32>
    %10 = arith.mulf %0, %9 : vector<8x32xf32>
    %c0_3 = arith.constant 0 : index
    %c0_4 = arith.constant 0 : index
    %11 = vector.load %arg2[%c0_3, %c0_4] : memref<32x32xf32, #tpu.memory_space<vmem>>, vector<32x32xf32>
    %c0_5 = arith.constant 0 : index
    %c0_6 = arith.constant 0 : index
    %12 = vector.load %arg3[%c0_5, %c0_6] : memref<1x32xf32, #tpu.memory_space<vmem>>, vector<1x32xf32>
    %cst_7 = arith.constant dense<0.000000e+00> : vector<8x32xf32>
    %13 = tpu.matmul %10, %11, %cst_7 {dimension_numbers = #tpu.dot_dimension_numbers<[1], [0], [0], [1], [0, 0, 1, 1], [], []>} : vector<8x32xf32>, vector<32x32xf32>, vector<8x32xf32> -> vector<8x32xf32>
    %14 = vector.broadcast %12 : vector<1x32xf32> to vector<8x32xf32>
    %15 = arith.addf %13, %14 : vector<8x32xf32>
    %cst_8 = arith.constant 0.000000e+00 : f32
    %16 = vector.broadcast %cst_8 : f32 to vector<8x32xf32>
    %17 = arith.cmpf oge, %15, %16 : vector<8x32xf32>
    %cst_9 = arith.constant 2.000000e-01 : f32
    %18 = vector.broadcast %cst_9 : f32 to vector<8x32xf32>
    %19 = arith.mulf %18, %15 : vector<8x32xf32>
    %20 = arith.select %17, %15, %19 : vector<8x32xi1>, vector<8x32xf32>
    %c0_10 = arith.constant 0 : index
    %c0_11 = arith.constant 0 : index
    %21 = vector.load %arg4[%c0_10, %c0_11] : memref<32x32xf32, #tpu.memory_space<vmem>>, vector<32x32xf32>
    %c0_12 = arith.constant 0 : index
    %c0_13 = arith.constant 0 : index
    %22 = vector.load %arg5[%c0_12, %c0_13] : memref<1x32xf32, #tpu.memory_space<vmem>>, vector<1x32xf32>
    %cst_14 = arith.constant dense<0.000000e+00> : vector<8x32xf32>
    %23 = tpu.matmul %20, %21, %cst_14 {dimension_numbers = #tpu.dot_dimension_numbers<[1], [0], [0], [1], [0, 0, 1, 1], [], []>} : vector<8x32xf32>, vector<32x32xf32>, vector<8x32xf32> -> vector<8x32xf32>
    %24 = vector.broadcast %22 : vector<1x32xf32> to vector<8x32xf32>
    %25 = arith.addf %23, %24 : vector<8x32xf32>
    %cst_15 = arith.constant 0.000000e+00 : f32
    %26 = vector.broadcast %cst_15 : f32 to vector<8x32xf32>
    %27 = arith.cmpf oge, %25, %26 : vector<8x32xf32>
    %cst_16 = arith.constant 2.000000e-01 : f32
    %28 = vector.broadcast %cst_16 : f32 to vector<8x32xf32>
    %29 = arith.mulf %28, %25 : vector<8x32xf32>
    %30 = arith.select %27, %25, %29 : vector<8x32xi1>, vector<8x32xf32>
    %c0_17 = arith.constant 0 : index
    %c0_18 = arith.constant 0 : index
    %31 = vector.load %arg6[%c0_17, %c0_18] : memref<32x64xf32, #tpu.memory_space<vmem>>, vector<32x64xf32>
    %c0_19 = arith.constant 0 : index
    %c0_20 = arith.constant 0 : index
    %32 = vector.load %arg7[%c0_19, %c0_20] : memref<1x64xf32, #tpu.memory_space<vmem>>, vector<1x64xf32>
    %cst_21 = arith.constant dense<0.000000e+00> : vector<8x64xf32>
    %33 = tpu.matmul %30, %31, %cst_21 {dimension_numbers = #tpu.dot_dimension_numbers<[1], [0], [0], [1], [0, 0, 1, 1], [], []>} : vector<8x32xf32>, vector<32x64xf32>, vector<8x64xf32> -> vector<8x64xf32>
    %34 = vector.broadcast %32 : vector<1x64xf32> to vector<8x64xf32>
    %35 = arith.addf %33, %34 : vector<8x64xf32>
    %cst_22 = arith.constant 0.000000e+00 : f32
    %36 = vector.broadcast %cst_22 : f32 to vector<8x64xf32>
    %37 = arith.cmpf oge, %35, %36 : vector<8x64xf32>
    %cst_23 = arith.constant 2.000000e-01 : f32
    %38 = vector.broadcast %cst_23 : f32 to vector<8x64xf32>
    %39 = arith.mulf %38, %35 : vector<8x64xf32>
    %40 = arith.select %37, %35, %39 : vector<8x64xi1>, vector<8x64xf32>
    %c0_24 = arith.constant 0 : index
    %c0_25 = arith.constant 0 : index
    %41 = vector.load %arg8[%c0_24, %c0_25] : memref<64x40xf32, #tpu.memory_space<vmem>>, vector<64x40xf32>
    %c0_26 = arith.constant 0 : index
    %c0_27 = arith.constant 0 : index
    %42 = vector.load %arg9[%c0_26, %c0_27] : memref<1x40xf32, #tpu.memory_space<vmem>>, vector<1x40xf32>
    %cst_28 = arith.constant dense<0.000000e+00> : vector<8x40xf32>
    %43 = tpu.matmul %40, %41, %cst_28 {dimension_numbers = #tpu.dot_dimension_numbers<[1], [0], [0], [1], [0, 0, 1, 1], [], []>} : vector<8x64xf32>, vector<64x40xf32>, vector<8x40xf32> -> vector<8x40xf32>
    %44 = vector.broadcast %42 : vector<1x40xf32> to vector<8x40xf32>
    %45 = arith.addf %43, %44 : vector<8x40xf32>
    %c0_29 = arith.constant 0 : index
    %c0_30 = arith.constant 0 : index
    %46 = vector.load %arg10[%c0_29, %c0_30] : memref<8x40xf32, #tpu.memory_space<vmem>>, vector<8x40xf32>
    tpu.vector_store %arg10[%c0_29, %c0_30], %45 {strides = array<i32>} : memref<8x40xf32, #tpu.memory_space<vmem>>, vector<8x40xf32>,
    return
  }
  func.func @transform_0(%arg0: i32) -> (i32, i32) {
    %c0_i32 = arith.constant 0 : i32
    %c0_i32_0 = arith.constant 0 : i32
    return %arg0, %c0_i32 : i32, i32
  }
  func.func @transform_1(%arg0: i32) -> (i32, i32) {
    %c0_i32 = arith.constant 0 : i32
    %c0_i32_0 = arith.constant 0 : i32
    %c0_i32_1 = arith.constant 0 : i32
    return %c0_i32, %c0_i32_0 : i32, i32
  }
  func.func @transform_2(%arg0: i32) -> (i32, i32) {
    %c0_i32 = arith.constant 0 : i32
    %c0_i32_0 = arith.constant 0 : i32
    %c0_i32_1 = arith.constant 0 : i32
    return %c0_i32, %c0_i32_0 : i32, i32
  }
  func.func @transform_3(%arg0: i32) -> (i32, i32) {
    %c0_i32 = arith.constant 0 : i32
    %c0_i32_0 = arith.constant 0 : i32
    %c0_i32_1 = arith.constant 0 : i32
    return %c0_i32, %c0_i32_0 : i32, i32
  }
  func.func @transform_4(%arg0: i32) -> (i32, i32) {
    %c0_i32 = arith.constant 0 : i32
    %c0_i32_0 = arith.constant 0 : i32
    %c0_i32_1 = arith.constant 0 : i32
    return %c0_i32, %c0_i32_0 : i32, i32
  }
  func.func @transform_5(%arg0: i32) -> (i32, i32) {
    %c0_i32 = arith.constant 0 : i32
    %c0_i32_0 = arith.constant 0 : i32
    %c0_i32_1 = arith.constant 0 : i32
    return %c0_i32, %c0_i32_0 : i32, i32
  }
  func.func @transform_6(%arg0: i32) -> (i32, i32) {
    %c0_i32 = arith.constant 0 : i32
    %c0_i32_0 = arith.constant 0 : i32
    %c0_i32_1 = arith.constant 0 : i32
    return %c0_i32, %c0_i32_0 : i32, i32
  }
  func.func @transform_7(%arg0: i32) -> (i32, i32) {
    %c0_i32 = arith.constant 0 : i32
    %c0_i32_0 = arith.constant 0 : i32
    %c0_i32_1 = arith.constant 0 : i32
    return %c0_i32, %c0_i32_0 : i32, i32
  }
  func.func @transform_8(%arg0: i32) -> (i32, i32) {
    %c0_i32 = arith.constant 0 : i32
    %c0_i32_0 = arith.constant 0 : i32
    %c0_i32_1 = arith.constant 0 : i32
    return %c0_i32, %c0_i32_0 : i32, i32
  }
  func.func @transform_9(%arg0: i32) -> (i32, i32) {
    %c0_i32 = arith.constant 0 : i32
    %c0_i32_0 = arith.constant 0 : i32
    return %arg0, %c0_i32 : i32, i32
  }
}

</mosaic_0001>

<llo_original>
// kernel: tpu_custom_call.1
$region0: #{tpu_custom_call.1}
  #allocation0 [shape = 'u32[]', space=smem, size = 0x4, offset = 0x4, fixed_abs, tag = 'smem constant byte address 0x4 - core index']
  #allocation1 [shape = 'u32[144,128]{1,0:T(1,128)}', space=vmem, size = 0x12000, scoped, tag = 'internal scratch']
  %s0 = inlined_call_operand.vmem [shape: f32[8,32], index: 0, kind: input, shape index: {}]
  %s1 = inlined_call_operand.vmem [shape: f32[32,32], index: 1, kind: input, shape index: {}]
  %s2 = inlined_call_operand.vmem [shape: f32[1,32], index: 2, kind: input, shape index: {}]
  %s3 = inlined_call_operand.vmem [shape: f32[32,32], index: 3, kind: input, shape index: {}]
  %s4 = inlined_call_operand.vmem [shape: f32[1,32], index: 4, kind: input, shape index: {}]
  %s5 = inlined_call_operand.vmem [shape: f32[32,64], index: 5, kind: input, shape index: {}]
  %s6 = inlined_call_operand.vmem [shape: f32[1,64], index: 6, kind: input, shape index: {}]
  %s7 = inlined_call_operand.vmem [shape: f32[64,40], index: 7, kind: input, shape index: {}]
  %s8 = inlined_call_operand.vmem [shape: f32[1,40], index: 8, kind: input, shape index: {}]
  %s9 = inlined_call_operand.hbm [shape: f32[8,40], index: 9, kind: output, shape index: {}]
  %s10 = sld [smem:[#allocation0]]
  $region46: #{tpu_custom_call.1} parent=0
    _
  %s12 = ssub.s32 1, %s10
  %s13 = scalar_select 0, %s12, %s10
  $region1: #{tpu_custom_call.1} parent=0
    #allocation2 [shape = 'u8[4096]{0}', space=vmem, size = 0x1000, scoped, tag = 'output window, operand 0, single buffered']
    #allocation3 [shape = 's32[1]{0}', space=sflag, size = 0x4, scoped, tag = 'scoped memory for tpu_custom_call.1']
    %14 = vsyncpa [#allocation3], 0
    // Predicated region
    $region2: #{tpu_custom_call.1} parent=1 // pred_check
      _
    $region3: #{tpu_custom_call.1} parent=1 // pred_check_branch
      %16 = sbr.rel (0) target = $region5
    $region4: #{tpu_custom_call.1} parent=1 // pred_region
      _
    $region5: #{tpu_custom_call.1} parent=1 // pred_fallthru
      _
    // Predicated region
    $region6: #{tpu_custom_call.1} parent=1 // pred_check
      _
    $region7: #{tpu_custom_call.1} parent=1 // pred_check_branch
      %18 = sbr.rel (0) target = $region9
    $region8: #{tpu_custom_call.1} parent=1 // pred_region
      _
    $region9: #{tpu_custom_call.1} parent=1 // pred_fallthru
      _
    // Predicated region
    $region10: #{tpu_custom_call.1} parent=1 // pred_check
      _
    $region11: #{tpu_custom_call.1} parent=1 // pred_check_branch
      %20 = sbr.rel (0) target = $region13
    $region12: #{tpu_custom_call.1} parent=1 // pred_region
      _
    $region13: #{tpu_custom_call.1} parent=1 // pred_fallthru
      _
    // Predicated region
    $region14: #{tpu_custom_call.1} parent=1 // pred_check
      _
    $region15: #{tpu_custom_call.1} parent=1 // pred_check_branch
      %22 = sbr.rel (0) target = $region17
    $region16: #{tpu_custom_call.1} parent=1 // pred_region
      _
    $region17: #{tpu_custom_call.1} parent=1 // pred_fallthru
      _
    // Predicated region
    $region18: #{tpu_custom_call.1} parent=1 // pred_check
      _
    $region19: #{tpu_custom_call.1} parent=1 // pred_check_branch
      %24 = sbr.rel (0) target = $region21
    $region20: #{tpu_custom_call.1} parent=1 // pred_region
      _
    $region21: #{tpu_custom_call.1} parent=1 // pred_fallthru
      _
    // Predicated region
    $region22: #{tpu_custom_call.1} parent=1 // pred_check
      _
    $region23: #{tpu_custom_call.1} parent=1 // pred_check_branch
      %26 = sbr.rel (0) target = $region25
    $region24: #{tpu_custom_call.1} parent=1 // pred_region
      _
    $region25: #{tpu_custom_call.1} parent=1 // pred_fallthru
      _
    // Predicated region
    $region26: #{tpu_custom_call.1} parent=1 // pred_check
      _
    $region27: #{tpu_custom_call.1} parent=1 // pred_check_branch
      %28 = sbr.rel (0) target = $region29
    $region28: #{tpu_custom_call.1} parent=1 // pred_region
      _
    $region29: #{tpu_custom_call.1} parent=1 // pred_fallthru
      _
    // Predicated region
    $region30: #{tpu_custom_call.1} parent=1 // pred_check
      _
    $region31: #{tpu_custom_call.1} parent=1 // pred_check_branch
      %30 = sbr.rel (0) target = $region33
    $region32: #{tpu_custom_call.1} parent=1 // pred_region
      _
    $region33: #{tpu_custom_call.1} parent=1 // pred_fallthru
      _
    // Predicated region
    $region34: #{tpu_custom_call.1} parent=1 // pred_check
      _
    $region35: #{tpu_custom_call.1} parent=1 // pred_check_branch
      %32 = sbr.rel (0) target = $region37
    $region36: #{tpu_custom_call.1} parent=1 // pred_region
      _
    $region37: #{tpu_custom_call.1} parent=1 // pred_fallthru
      _
    %v33 = vld [vmem:[%s0] sm:$0xff]
    %v34 = vmul.f32 %v33, %v33
    %vm35 = vcmask 261120
    %v36 = vsel %vm35, %v34, 0.0
    %37 = vadd.xlane.f32.xlu0 %v36
    %v38 = vpop.xlane.xlu0 %37
    %v39 = vrcp.pop 32.0
    %v40 = vmul.f32 %v38, %v39
    %v41 = vadd.f32 %v40, 1e-08
    %v42 = vrsqrt.pop %v41
    %v43 = vmul.f32 %v33, %v42
    %v44 = vld [vmem:[%s1] sm:$0xff]
    %v45 = vld [vmem:[%s1 + $0x8] sm:$0xff]
    %v46 = vld [vmem:[%s1 + $0x10] sm:$0xff]
    %v47 = vld [vmem:[%s1 + $0x18] sm:$0xff]
    %v48 = vld [vmem:[%s2] sm:$0x1]
    %v50 = vlaneseq
    %v51 = vshrl.u32 %v50, 7
    %v52 = vsub.s32 0, %v51
    %v53 = vrot.slane %v48, %v52
    %v56 = vsel %vm35, %v43, 0
    %58 = vmatprep.subr.mxu0 0.0
    %59 = vmatpush1.msra.mxu0 %v44
    %60 = vmatprep.subr.mxu0 0.0
    %61 = vmatpush1.msra.mxu0 %v45
    %62 = vmatprep.subr.mxu0 0.0
    %63 = vmatpush1.msra.mxu0 %v46
    %64 = vmatprep.subr.mxu0 0.0
    %65 = vmatpush1.msra.mxu0 %v47
    %66 = vmatprep.subr.mxu0 0.0
    %67 = vmatpush1.msra.mxu0 0.0
    %68 = vmatprep.subr.mxu0 0.0
    %69 = vmatpush1.msra.mxu0 0.0
    %70 = vmatprep.subr.mxu0 0.0
    %71 = vmatpush1.msra.mxu0 0.0
    %72 = vmatprep.subr.mxu0 0.0
    %73 = vmatpush1.msra.mxu0 0.0
    %74 = vmatprep.subr.mxu0 0.0
    %75 = vmatpush1.msra.mxu0 0.0
    %76 = vmatprep.subr.mxu0 0.0
    %77 = vmatpush1.msra.mxu0 0.0
    %78 = vmatprep.subr.mxu0 0.0
    %79 = vmatpush1.msra.mxu0 0.0
    %80 = vmatprep.subr.mxu0 0.0
    %81 = vmatpush1.msra.mxu0 0.0
    %82 = vmatprep.subr.mxu0 0.0
    %83 = vmatpush1.msra.mxu0 0.0
    %84 = vmatprep.subr.mxu0 0.0
    %85 = vmatpush1.msra.mxu0 0.0
    %86 = vmatprep.subr.mxu0 0.0
    %87 = vmatpush1.msra.mxu0 0.0
    %88 = vmatprep.subr.mxu0 0.0
    %89 = vmatpush1.msra.mxu0 0.0
    %90 = vmatprep.subr.mxu0 0.0
    %91 = vmatpush1.msra.mxu0 0.0
    %92 = vmatprep.subr.mxu0 0.0
    %93 = vmatpush1.msra.mxu0 0.0
    %94 = vmatprep.subr.mxu0 0.0
    %95 = vmatpush1.msra.mxu0 0.0
    %96 = vmatprep.subr.mxu0 0.0
    %97 = vmatpush1.msra.mxu0 0.0
    %98 = vmatprep.subr.mxu0 0.0
    %99 = vmatpush1.msra.mxu0 0.0
    %100 = vmatprep.subr.mxu0 0.0
    %101 = vmatpush1.msra.mxu0 0.0
    %102 = vmatprep.subr.mxu0 0.0
    %103 = vmatpush1.msra.mxu0 0.0
    %104 = vmatprep.subr.mxu0 0.0
    %105 = vmatpush1.msra.mxu0 0.0
    %106 = vmatprep.subr.mxu0 0.0
    %107 = vmatpush1.msra.mxu0 0.0
    %108 = vmatprep.subr.mxu0 0.0
    %109 = vmatpush1.msra.mxu0 0.0
    %110 = vmatprep.subr.mxu0 0.0
    %111 = vmatpush1.msra.mxu0 0.0
    %112 = vmatprep.subr.mxu0 0.0
    %113 = vmatpush1.msra.mxu0 0.0
    %114 = vmatprep.subr.mxu0 0.0
    %115 = vmatpush1.msra.mxu0 0.0
    %116 = vmatprep.subr.mxu0 0.0
    %117 = vmatpush1.msra.mxu0 0.0
    %118 = vmatprep.subr.mxu0 0.0
    %119 = vmatpush1.msra.mxu0 0.0
    %120 = vmatprep.subr.mxu0 0.0
    %121 = vmatpush1.msra.mxu0 0.0
    %122 = vmatprep.mubr.f32.mxu0 0.0
    %123 = vmatmul.mubr.f32.gmra.mrb[0].mxu0 %v56
    %v124 = vpop.f32.mrb[0].mxu0
    %v125 = vadd.f32 %v53, %v124
    %v126 = vpop.f32.mrb[0].mxu0
    %127 = vdwg.mxu0
    %vm128 = vcmp.ge.f32.partialorder %v125, 0.0
    %v129 = vmul.f32 %v125, 0.2
    %v130 = vsel %vm128, %v125, %v129
    %v131 = vld [vmem:[%s3] sm:$0xff]
    %v132 = vld [vmem:[%s3 + $0x8] sm:$0xff]
    %v133 = vld [vmem:[%s3 + $0x10] sm:$0xff]
    %v134 = vld [vmem:[%s3 + $0x18] sm:$0xff]
    %v135 = vld [vmem:[%s4] sm:$0x1]
    %v137 = vlaneseq
    %v138 = vshrl.u32 %v137, 7
    %v139 = vsub.s32 0, %v138
    %v140 = vrot.slane %v135, %v139
    %v143 = vsel %vm35, %v130, 0
    %145 = vmatprep.subr.mxu0 0.0
    %146 = vmatpush1.msra.mxu0 %v131
    %147 = vmatprep.subr.mxu0 0.0
    %148 = vmatpush1.msra.mxu0 %v132
    %149 = vmatprep.subr.mxu0 0.0
    %150 = vmatpush1.msra.mxu0 %v133
    %151 = vmatprep.subr.mxu0 0.0
    %152 = vmatpush1.msra.mxu0 %v134
    %153 = vmatprep.subr.mxu0 0.0
    %154 = vmatpush1.msra.mxu0 0.0
    %155 = vmatprep.subr.mxu0 0.0
    %156 = vmatpush1.msra.mxu0 0.0
    %157 = vmatprep.subr.mxu0 0.0
    %158 = vmatpush1.msra.mxu0 0.0
    %159 = vmatprep.subr.mxu0 0.0
    %160 = vmatpush1.msra.mxu0 0.0
    %161 = vmatprep.subr.mxu0 0.0
    %162 = vmatpush1.msra.mxu0 0.0
    %163 = vmatprep.subr.mxu0 0.0
    %164 = vmatpush1.msra.mxu0 0.0
    %165 = vmatprep.subr.mxu0 0.0
    %166 = vmatpush1.msra.mxu0 0.0
    %167 = vmatprep.subr.mxu0 0.0
    %168 = vmatpush1.msra.mxu0 0.0
    %169 = vmatprep.subr.mxu0 0.0
    %170 = vmatpush1.msra.mxu0 0.0
    %171 = vmatprep.subr.mxu0 0.0
    %172 = vmatpush1.msra.mxu0 0.0
    %173 = vmatprep.subr.mxu0 0.0
    %174 = vmatpush1.msra.mxu0 0.0
    %175 = vmatprep.subr.mxu0 0.0
    %176 = vmatpush1.msra.mxu0 0.0
    %177 = vmatprep.subr.mxu0 0.0
    %178 = vmatpush1.msra.mxu0 0.0
    %179 = vmatprep.subr.mxu0 0.0
    %180 = vmatpush1.msra.mxu0 0.0
    %181 = vmatprep.subr.mxu0 0.0
    %182 = vmatpush1.msra.mxu0 0.0
    %183 = vmatprep.subr.mxu0 0.0
    %184 = vmatpush1.msra.mxu0 0.0
    %185 = vmatprep.subr.mxu0 0.0
    %186 = vmatpush1.msra.mxu0 0.0
    %187 = vmatprep.subr.mxu0 0.0
    %188 = vmatpush1.msra.mxu0 0.0
    %189 = vmatprep.subr.mxu0 0.0
    %190 = vmatpush1.msra.mxu0 0.0
    %191 = vmatprep.subr.mxu0 0.0
    %192 = vmatpush1.msra.mxu0 0.0
    %193 = vmatprep.subr.mxu0 0.0
    %194 = vmatpush1.msra.mxu0 0.0
    %195 = vmatprep.subr.mxu0 0.0
    %196 = vmatpush1.msra.mxu0 0.0
    %197 = vmatprep.subr.mxu0 0.0
    %198 = vmatpush1.msra.mxu0 0.0
    %199 = vmatprep.subr.mxu0 0.0
    %200 = vmatpush1.msra.mxu0 0.0
    %201 = vmatprep.subr.mxu0 0.0
    %202 = vmatpush1.msra.mxu0 0.0
    %203 = vmatprep.subr.mxu0 0.0
    %204 = vmatpush1.msra.mxu0 0.0
    %205 = vmatprep.subr.mxu0 0.0
    %206 = vmatpush1.msra.mxu0 0.0
    %207 = vmatprep.subr.mxu0 0.0
    %208 = vmatpush1.msra.mxu0 0.0
    %209 = vmatprep.mubr.f32.mxu0 0.0
    %210 = vmatmul.mubr.f32.gmra.mrb[0].mxu0 %v143
    %v211 = vpop.f32.mrb[0].mxu0
    %v212 = vadd.f32 %v140, %v211
    %v213 = vpop.f32.mrb[0].mxu0
    %214 = vdwg.mxu0
    %vm215 = vcmp.ge.f32.partialorder %v212, 0.0
    %v216 = vmul.f32 %v212, 0.2
    %v217 = vsel %vm215, %v212, %v216
    %v218 = vld [vmem:[%s5] sm:$0xff]
    %v219 = vld [vmem:[%s5 + $0x8] sm:$0xff]
    %v220 = vld [vmem:[%s5 + $0x10] sm:$0xff]
    %v221 = vld [vmem:[%s5 + $0x18] sm:$0xff]
    %v222 = vld [vmem:[%s6] sm:$0x1]
    %v224 = vlaneseq
    %v225 = vshrl.u32 %v224, 7
    %v226 = vsub.s32 0, %v225
    %v227 = vrot.slane %v222, %v226
    %v230 = vsel %vm35, %v217, 0
    %232 = vmatprep.subr.mxu0 0.0
    %233 = vmatpush1.msra.mxu0 %v218
    %234 = vmatprep.subr.mxu0 0.0
    %235 = vmatpush1.msra.mxu0 %v219
    %236 = vmatprep.subr.mxu0 0.0
    %237 = vmatpush1.msra.mxu0 %v220
    %238 = vmatprep.subr.mxu0 0.0
    %239 = vmatpush1.msra.mxu0 %v221
    %240 = vmatprep.subr.mxu0 0.0
    %241 = vmatpush1.msra.mxu0 0.0
    %242 = vmatprep.subr.mxu0 0.0
    %243 = vmatpush1.msra.mxu0 0.0
    %244 = vmatprep.subr.mxu0 0.0
    %245 = vmatpush1.msra.mxu0 0.0
    %246 = vmatprep.subr.mxu0 0.0
    %247 = vmatpush1.msra.mxu0 0.0
    %248 = vmatprep.subr.mxu0 0.0
    %249 = vmatpush1.msra.mxu0 0.0
    %250 = vmatprep.subr.mxu0 0.0
    %251 = vmatpush1.msra.mxu0 0.0
    %252 = vmatprep.subr.mxu0 0.0
    %253 = vmatpush1.msra.mxu0 0.0
    %254 = vmatprep.subr.mxu0 0.0
    %255 = vmatpush1.msra.mxu0 0.0
    %256 = vmatprep.subr.mxu0 0.0
    %257 = vmatpush1.msra.mxu0 0.0
    %258 = vmatprep.subr.mxu0 0.0
    %259 = vmatpush1.msra.mxu0 0.0
    %260 = vmatprep.subr.mxu0 0.0
    %261 = vmatpush1.msra.mxu0 0.0
    %262 = vmatprep.subr.mxu0 0.0
    %263 = vmatpush1.msra.mxu0 0.0
    %264 = vmatprep.subr.mxu0 0.0
    %265 = vmatpush1.msra.mxu0 0.0
    %266 = vmatprep.subr.mxu0 0.0
    %267 = vmatpush1.msra.mxu0 0.0
    %268 = vmatprep.subr.mxu0 0.0
    %269 = vmatpush1.msra.mxu0 0.0
    %270 = vmatprep.subr.mxu0 0.0
    %271 = vmatpush1.msra.mxu0 0.0
    %272 = vmatprep.subr.mxu0 0.0
    %273 = vmatpush1.msra.mxu0 0.0
    %274 = vmatprep.subr.mxu0 0.0
    %275 = vmatpush1.msra.mxu0 0.0
    %276 = vmatprep.subr.mxu0 0.0
    %277 = vmatpush1.msra.mxu0 0.0
    %278 = vmatprep.subr.mxu0 0.0
    %279 = vmatpush1.msra.mxu0 0.0
    %280 = vmatprep.subr.mxu0 0.0
    %281 = vmatpush1.msra.mxu0 0.0
    %282 = vmatprep.subr.mxu0 0.0
    %283 = vmatpush1.msra.mxu0 0.0
    %284 = vmatprep.subr.mxu0 0.0
    %285 = vmatpush1.msra.mxu0 0.0
    %286 = vmatprep.subr.mxu0 0.0
    %287 = vmatpush1.msra.mxu0 0.0
    %288 = vmatprep.subr.mxu0 0.0
    %289 = vmatpush1.msra.mxu0 0.0
    %290 = vmatprep.subr.mxu0 0.0
    %291 = vmatpush1.msra.mxu0 0.0
    %292 = vmatprep.subr.mxu0 0.0
    %293 = vmatpush1.msra.mxu0 0.0
    %294 = vmatprep.subr.mxu0 0.0
    %295 = vmatpush1.msra.mxu0 0.0
    %296 = vmatprep.mubr.f32.mxu0 0.0
    %297 = vmatmul.mubr.f32.gmra.mrb[0].mxu0 %v230
    %v298 = vpop.f32.mrb[0].mxu0
    %v299 = vadd.f32 %v227, %v298
    %v300 = vpop.f32.mrb[0].mxu0
    %301 = vdwg.mxu0
    %vm302 = vcmp.ge.f32.partialorder %v299, 0.0
    %v303 = vmul.f32 %v299, 0.2
    %v304 = vsel %vm302, %v299, %v303
    %v305 = vld [vmem:[%s7] sm:$0xff]
    %v306 = vld [vmem:[%s7 + $0x8] sm:$0xff]
    %v307 = vld [vmem:[%s7 + $0x10] sm:$0xff]
    %v308 = vld [vmem:[%s7 + $0x18] sm:$0xff]
    %v309 = vld [vmem:[%s7 + $0x20] sm:$0xff]
    %v310 = vld [vmem:[%s7 + $0x28] sm:$0xff]
    %v311 = vld [vmem:[%s7 + $0x30] sm:$0xff]
    %v312 = vld [vmem:[%s7 + $0x38] sm:$0xff]
    %v313 = vld [vmem:[%s8] sm:$0x1]
    %v315 = vlaneseq
    %v316 = vshrl.u32 %v315, 7
    %v317 = vsub.s32 0, %v316
    %v318 = vrot.slane %v313, %v317
    %vm320 = vcmask 523264
    %v322 = vsel %vm320, %v304, 0
    %324 = vmatprep.subr.mxu0 0.0
    %325 = vmatpush1.msra.mxu0 %v305
    %326 = vmatprep.subr.mxu0 0.0
    %327 = vmatpush1.msra.mxu0 %v306
    %328 = vmatprep.subr.mxu0 0.0
    %329 = vmatpush1.msra.mxu0 %v307
    %330 = vmatprep.subr.mxu0 0.0
    %331 = vmatpush1.msra.mxu0 %v308
    %332 = vmatprep.subr.mxu0 0.0
    %333 = vmatpush1.msra.mxu0 %v309
    %334 = vmatprep.subr.mxu0 0.0
    %335 = vmatpush1.msra.mxu0 %v310
    %336 = vmatprep.subr.mxu0 0.0
    %337 = vmatpush1.msra.mxu0 %v311
    %338 = vmatprep.subr.mxu0 0.0
    %339 = vmatpush1.msra.mxu0 %v312
    %340 = vmatprep.subr.mxu0 0.0
    %341 = vmatpush1.msra.mxu0 0.0
    %342 = vmatprep.subr.mxu0 0.0
    %343 = vmatpush1.msra.mxu0 0.0
    %344 = vmatprep.subr.mxu0 0.0
    %345 = vmatpush1.msra.mxu0 0.0
    %346 = vmatprep.subr.mxu0 0.0
    %347 = vmatpush1.msra.mxu0 0.0
    %348 = vmatprep.subr.mxu0 0.0
    %349 = vmatpush1.msra.mxu0 0.0
    %350 = vmatprep.subr.mxu0 0.0
    %351 = vmatpush1.msra.mxu0 0.0
    %352 = vmatprep.subr.mxu0 0.0
    %353 = vmatpush1.msra.mxu0 0.0
    %354 = vmatprep.subr.mxu0 0.0
    %355 = vmatpush1.msra.mxu0 0.0
    %356 = vmatprep.subr.mxu0 0.0
    %357 = vmatpush1.msra.mxu0 0.0
    %358 = vmatprep.subr.mxu0 0.0
    %359 = vmatpush1.msra.mxu0 0.0
    %360 = vmatprep.subr.mxu0 0.0
    %361 = vmatpush1.msra.mxu0 0.0
    %362 = vmatprep.subr.mxu0 0.0
    %363 = vmatpush1.msra.mxu0 0.0
    %364 = vmatprep.subr.mxu0 0.0
    %365 = vmatpush1.msra.mxu0 0.0
    %366 = vmatprep.subr.mxu0 0.0
    %367 = vmatpush1.msra.mxu0 0.0
    %368 = vmatprep.subr.mxu0 0.0
    %369 = vmatpush1.msra.mxu0 0.0
    %370 = vmatprep.subr.mxu0 0.0
    %371 = vmatpush1.msra.mxu0 0.0
    %372 = vmatprep.subr.mxu0 0.0
    %373 = vmatpush1.msra.mxu0 0.0
    %374 = vmatprep.subr.mxu0 0.0
    %375 = vmatpush1.msra.mxu0 0.0
    %376 = vmatprep.subr.mxu0 0.0
    %377 = vmatpush1.msra.mxu0 0.0
    %378 = vmatprep.subr.mxu0 0.0
    %379 = vmatpush1.msra.mxu0 0.0
    %380 = vmatprep.subr.mxu0 0.0
    %381 = vmatpush1.msra.mxu0 0.0
    %382 = vmatprep.subr.mxu0 0.0
    %383 = vmatpush1.msra.mxu0 0.0
    %384 = vmatprep.subr.mxu0 0.0
    %385 = vmatpush1.msra.mxu0 0.0
    %386 = vmatprep.subr.mxu0 0.0
    %387 = vmatpush1.msra.mxu0 0.0
    %388 = vmatprep.mubr.f32.mxu0 0.0
    %389 = vmatmul.mubr.f32.gmra.mrb[0].mxu0 %v322
    %v390 = vpop.f32.mrb[0].mxu0
    %v391 = vadd.f32 %v318, %v390
    %v392 = vpop.f32.mrb[0].mxu0
    %393 = vdwg.mxu0
    %vm394 = vcmask 326656
    %395 = vst.msk [vmem:[#allocation2] sm:$0xff] %vm394, %v391
    // Predicated region
    $region38: #{tpu_custom_call.1} parent=1 // pred_check
      _
    $region39: #{tpu_custom_call.1} parent=1 // pred_check_branch
      %397 = sbr.rel (0) target = $region41
    $region40: #{tpu_custom_call.1} parent=1 // pred_region
      %s399 = ssub.s32 128, 128
      %400 = vsyncadd [#allocation3], %s399
      %s402 = sshll.u32 [#allocation2], 4
      %s403 = int_to_ptr.vmem [resolvable:$true] %s402
      %405 = dma.vmem_to_hbm [thread:$0]  %s403, 128, %s9, [#allocation3]
    $region41: #{tpu_custom_call.1} parent=1 // pred_fallthru
      _
    // Predicated region
    $region42: #{tpu_custom_call.1} parent=1 // pred_check
      _
    $region43: #{tpu_custom_call.1} parent=1 // pred_check_branch
      %407 = sbr.rel (0) target = $region45
    $region44: #{tpu_custom_call.1} parent=1 // pred_region
      %408 = dma.done [#allocation3], 128
    $region45: #{tpu_custom_call.1} parent=1 // pred_fallthru
      _
    %409 = vsyncpa [#allocation3], 1

</llo_original>
